<compile_context>
chip_gen: v7x
topology: tpu7x:2x2x1
jax: 0.10.0
libtpu: 0.0.40
codegen_flags: <defaults>
</compile_context>

<pallas_src>
import jax
import jax.numpy as jnp
import numpy as np
from jax import lax
from jax.experimental import pallas as pl
from jax.experimental.pallas import tpu as pltpu

# ---- problem sizes ----------------------------------------------------------
B, CIN, H, W = 2, 4, 16, 16
COUT, K, NCLS = 8, 3, 10
HW = H * W                       # 256 flat spatial positions (lane axis)
LANE = 128                       # TPU lane width
OUT_ROWS = 8                     # output slab sublanes
LOSS_ROW = OUT_ROWS - 1
NEG = -1e30                      # in-kernel softmax mask value (never stored)

KDIM = 128                       # fused-conv contraction depth (MXU aligned)
TAP_ROWS = K * K * B * CIN       # 72 real im2col rows
BIAS_COL = TAP_ROWS              # column 72 of the fused weight = conv bias
XPAD_LANES = 512                 # padded plane buffer (vreg-aligned copy @128)
XOFF = 128                       # image data lives at lanes [128, 384)
PARAM_ROWS = 40                  # 16 conv-W + 16 fc-W + 1 fc-b + 7 pad


# ------------------------------- Pallas kernel -------------------------------
def special_model_kernel(x_ref, params_ref, labels_ref, out_ref,
                         xpad_ref, col_ref):
    # -------- zero-padded plane buffer (replaces wrapper-side jnp.pad) -------
    xpad_ref[...] = jnp.zeros((B * CIN, XPAD_LANES), jnp.float32)
    xpad_ref[:, XOFF:XOFF + HW] = x_ref[...]                 # aligned copy

    # -------- build im2col matrix: 9 shifted+masked taps + bias row ----------
    p = lax.broadcasted_iota(jnp.int32, (1, HW), 1)
    col_in_row = p % W
    not_left = col_in_row != 0                 # mask for dx == 0 taps
    not_right = col_in_row != (W - 1)          # mask for dx == K-1 taps

    for dy in range(K):
        for dx in range(K):
            off = XOFF + (dy - 1) * W + (dx - 1)
            tap = xpad_ref[:, off:off + HW]                  # (B*CIN, HW)
            if dx == 0:
                tap = jnp.where(not_left, tap, 0.0)
            elif dx == K - 1:
                tap = jnp.where(not_right, tap, 0.0)
            t = dy * K + dx
            col_ref[8 * t:8 * (t + 1), :] = tap
    col_ref[TAP_ROWS:TAP_ROWS + 8, :] = jnp.ones((8, HW), jnp.float32)  # bias tap
    col_ref[TAP_ROWS + 8:KDIM, :] = jnp.zeros((KDIM - TAP_ROWS - 8, HW),
                                              jnp.float32)   # keep K=128 exact

    # -------- single fused conv+bias matmul, then ReLU ------------------------
    w_conv = params_ref[0:B * COUT, :]                        # (16, 128)
    y = jnp.dot(w_conv, col_ref[...], preferred_element_type=jnp.float32)
    y = jnp.maximum(y, 0.0)                                   # (16, 256)

    # -------- global average pool + FC head (no second MXU push) -------------
    pooled = jnp.sum(y, axis=1, keepdims=True) * (1.0 / HW)   # (16, 1)
    wfc = params_ref[B * COUT:2 * B * COUT, :]                # (16, 128)
    bfc = params_ref[2 * B * COUT:2 * B * COUT + 1, :]        # (1, 128)
    z = pooled * wfc                                          # (16, 128)

    lane = lax.broadcasted_iota(jnp.int32, (1, LANE), 1)
    valid = lane < NCLS                                       # real class lanes

    logit_rows = []
    nll_rows = []
    for b in range(B):
        # batch-b logits: sublane reduction over its COUT rows of z
        lrow = jnp.sum(z[b * COUT:(b + 1) * COUT, :],
                       axis=0, keepdims=True) + bfc           # (1, 128)
        # cross-entropy with explicit masking of padded lanes (no sentinel)
        masked = jnp.where(valid, lrow, NEG)
        m = jnp.max(masked, axis=-1, keepdims=True)           # (1, 1)
        ssum = jnp.sum(jnp.where(valid, jnp.exp(masked - m), 0.0),
                       axis=-1, keepdims=True)
        lse = jnp.log(ssum) + m
        picked = jnp.sum(jnp.where(lane == labels_ref[b], lrow, 0.0),
                         axis=-1, keepdims=True)
        logit_rows.append(lrow)
        nll_rows.append(lse - picked)                         # (1, 1)

    nll_total = nll_rows[0]
    for b in range(1, B):
        nll_total = nll_total + nll_rows[b]
    loss = nll_total * (1.0 / B)                              # (1, 1)

    # -------- single lane-dense (8,128) output slab, built in registers ------
    row = lax.broadcasted_iota(jnp.int32, (OUT_ROWS, LANE), 0)
    slab = jnp.where(row == LOSS_ROW,
                     jnp.broadcast_to(loss, (OUT_ROWS, LANE)),
                     jnp.zeros((OUT_ROWS, LANE), jnp.float32))
    for b in range(B):
        slab = jnp.where(row == b,
                         jnp.broadcast_to(logit_rows[b], (OUT_ROWS, LANE)),
                         slab)
    out_ref[...] = slab                                       # one unmasked vst


# ------------------------------- JAX glue ------------------------------------
_VMEM = pl.BlockSpec(memory_space=pltpu.MemorySpace.VMEM)
_SMEM = pl.BlockSpec(memory_space=pltpu.MemorySpace.SMEM)


def special_model_forward(x_nchw, labels, params):
    """Forward of the (synthetic) inner model: returns (logits, cls_loss)."""
    x_flat = x_nchw.reshape(B * CIN, HW)          # free reshape of NCHW input
    slab = pl.pallas_call(
        special_model_kernel,
        out_shape=jax.ShapeDtypeStruct((OUT_ROWS, LANE), jnp.float32),
        in_specs=[_VMEM, _VMEM, _SMEM],
        out_specs=_VMEM,
        scratch_shapes=[pltpu.VMEM((B * CIN, XPAD_LANES), jnp.float32),
                        pltpu.VMEM((KDIM, HW), jnp.float32)],
    )(x_flat, params, labels.astype(jnp.int32))
    # padded class lanes of the logits rows are exact zeros; wrapper slices.
    return slab[:B, :NCLS], slab[LOSS_ROW, 0]


def pack_params(wconv_pt, bconv_pt, wfc, bfc_v):
    """One-time repack of PyTorch-layout parameters into ONE (40,128) slab."""
    # fused conv weight (block-diagonal over batch), one column per im2col row:
    #   W[b'*COUT+o, t*B*CIN + b*CIN + c] = wconv_pt[o, c, dy, dx] * (b == b')
    wt = jnp.transpose(wconv_pt, (2, 3, 0, 1)).reshape(K * K, COUT, CIN)
    eye_b = jnp.eye(B, dtype=jnp.float32)
    wtaps = jnp.einsum('bd,toc->tbodc', eye_b, wt).reshape(K * K, B * COUT,
                                                           B * CIN)
    w_fused = jnp.transpose(wtaps, (1, 0, 2)).reshape(B * COUT, TAP_ROWS)
    w_rows = jnp.zeros((B * COUT, LANE), jnp.float32).at[:, :TAP_ROWS].set(w_fused)
    w_rows = w_rows.at[:, BIAS_COL].set(jnp.tile(bconv_pt, (B,)))   # bias column
    # FC weight zero-padded to 128 lanes and tiled per batch row
    wfc_pad = jnp.zeros((COUT, LANE), jnp.float32).at[:, :NCLS].set(wfc)
    wfc_rows = jnp.tile(wfc_pad, (B, 1))                            # (16, 128)
    # FC bias; padded class lanes stay exactly zero (no -1e30 sentinel)
    bfc_row = jnp.zeros((1, LANE), jnp.float32).at[0, :NCLS].set(bfc_v)
    pad_rows = jnp.zeros((PARAM_ROWS - 2 * B * COUT - 1, LANE), jnp.float32)
    return jnp.concatenate([w_rows, wfc_rows, bfc_row, pad_rows], axis=0)


# ------------------------------- main -----------------------------------------
if __name__ == "__main__":
    key = jax.random.PRNGKey(0)
    k1, k2, k3, k4, k5, k6 = jax.random.split(key, 6)

    # Deterministic synthetic parameters in PyTorch layouts.
    wconv_pt = jax.random.normal(k1, (COUT, CIN, K, K), jnp.float32) * 0.1
    bconv_pt = jax.random.normal(k2, (COUT,), jnp.float32) * 0.1
    wfc = jax.random.normal(k3, (COUT, NCLS), jnp.float32) * 0.1
    bfc_v = jax.random.normal(k4, (NCLS,), jnp.float32) * 0.1
    params = pack_params(wconv_pt, bconv_pt, wfc, bfc_v)

    x = jax.random.normal(k5, (B, CIN, H, W), jnp.float32)    # NCHW input
    labels = jax.random.randint(k6, (B,), 0, NCLS)            # target

    fwd = jax.jit(special_model_forward)
    logits, cls_loss = fwd(x, labels, params)
    jax.block_until_ready((logits, cls_loss))

    # Pure-JAX reference (conv in NCHW) to verify the kernel.
    y_ref = lax.conv_general_dilated(
        x, wconv_pt, (1, 1), 'SAME',
        dimension_numbers=('NCHW', 'OIHW', 'NCHW'))
    y_ref = jnp.maximum(y_ref + bconv_pt.reshape(1, COUT, 1, 1), 0.0)
    pooled_ref = jnp.mean(y_ref, axis=(2, 3))
    logits_ref = pooled_ref @ wfc + bfc_v
    lse_ref = jax.scipy.special.logsumexp(logits_ref, axis=-1)
    loss_ref = jnp.mean(lse_ref - logits_ref[jnp.arange(B), labels])

    assert np.allclose(np.asarray(logits), np.asarray(logits_ref),
                       rtol=1e-3, atol=5e-4), "logits mismatch"
    assert np.allclose(float(cls_loss), float(loss_ref),
                       rtol=1e-3, atol=5e-4), "cls_loss mismatch"

    print("KERNEL_OK")
</pallas_src>

<mosaic_0001>
module attributes {stable_mosaic.version = 11 : i64} {
  func.func @special_model_kernel(%arg0: memref<8x256xf32, #tpu.memory_space<vmem>>, %arg1: memref<40x128xf32, #tpu.memory_space<vmem>>, %arg2: memref<2xi32, #tpu.memory_space<smem>>, %arg3: memref<8x128xf32, #tpu.memory_space<vmem>>, %arg4: memref<8x512xf32, #tpu.memory_space<vmem>>, %arg5: memref<128x256xf32, #tpu.memory_space<vmem>>) attributes {dimension_semantics = [], scalar_prefetch = 0 : i64, scratch_operands = 2 : i64, tpu.core_type = #tpu.core_type<tc>} {
    %cst = arith.constant 0.000000e+00 : f32
    %0 = vector.broadcast %cst : f32 to vector<8x512xf32>
    %c0 = arith.constant 0 : index
    %c0_0 = arith.constant 0 : index
    %1 = vector.load %arg4[%c0, %c0_0] : memref<8x512xf32, #tpu.memory_space<vmem>>, vector<8x512xf32>
    tpu.vector_store %arg4[%c0, %c0_0], %0 {strides = array<i32>} : memref<8x512xf32, #tpu.memory_space<vmem>>, vector<8x512xf32>,
    %c0_1 = arith.constant 0 : index
    %c0_2 = arith.constant 0 : index
    %2 = vector.load %arg0[%c0_1, %c0_2] : memref<8x256xf32, #tpu.memory_space<vmem>>, vector<8x256xf32>
    %c0_3 = arith.constant 0 : index
    %c128 = arith.constant 128 : index
    %3 = vector.load %arg4[%c0_3, %c128] : memref<8x512xf32, #tpu.memory_space<vmem>>, vector<8x256xf32>
    tpu.vector_store %arg4[%c0_3, %c128], %2 {strides = array<i32>} : memref<8x512xf32, #tpu.memory_space<vmem>>, vector<8x256xf32>,
    %4 = tpu.iota {dimensions = array<i32: 1>} : vector<1x256xi32>
    %c16_i32 = arith.constant 16 : i32
    %c0_i32 = arith.constant 0 : i32
    %5 = arith.cmpi eq, %c16_i32, %c0_i32 : i32
    %c1_i32 = arith.constant 1 : i32
    %6 = arith.select %5, %c1_i32, %c16_i32 : i32
    %7 = vector.broadcast %6 : i32 to vector<1x256xi32>
    %8 = arith.remsi %4, %7 : vector<1x256xi32>
    %c0_i32_4 = arith.constant 0 : i32
    %9 = vector.broadcast %c0_i32_4 : i32 to vector<1x256xi32>
    %10 = arith.cmpi ne, %8, %9 : vector<1x256xi32>
    %c0_i32_5 = arith.constant 0 : i32
    %11 = vector.broadcast %c0_i32_5 : i32 to vector<1x256xi32>
    %12 = arith.cmpi slt, %8, %11 : vector<1x256xi32>
    %c0_i32_6 = arith.constant 0 : i32
    %13 = arith.cmpi slt, %6, %c0_i32_6 : i32
    %14 = vector.broadcast %13 : i1 to vector<1x256xi1>
    %15 = vector.broadcast %14 : vector<1x256xi1> to vector<1x256xi1>
    %16 = arith.xori %12, %15 : vector<1x256xi1>
    %17 = arith.andi %16, %10 : vector<1x256xi1>
    %18 = vector.broadcast %6 : i32 to vector<1x256xi32>
    %19 = arith.addi %8, %18 : vector<1x256xi32>
    %20 = arith.select %17, %19, %8 : vector<1x256xi1>, vector<1x256xi32>
    %c0_i32_7 = arith.constant 0 : i32
    %21 = vector.broadcast %c0_i32_7 : i32 to vector<1x256xi32>
    %22 = arith.cmpi ne, %20, %21 : vector<1x256xi32>
    %c15_i32 = arith.constant 15 : i32
    %23 = vector.broadcast %c15_i32 : i32 to vector<1x256xi32>
    %24 = arith.cmpi ne, %20, %23 : vector<1x256xi32>
    %c0_8 = arith.constant 0 : index
    %c111 = arith.constant 111 : index
    %25 = vector.load %arg4[%c0_8, %c111] : memref<8x512xf32, #tpu.memory_space<vmem>>, vector<8x256xf32>
    %cst_9 = arith.constant 0.000000e+00 : f32
    %26 = vector.shape_cast %22 : vector<1x256xi1> to vector<1x256xi1>
    %27 = vector.broadcast %26 : vector<1x256xi1> to vector<8x256xi1>
    %28 = vector.broadcast %cst_9 : f32 to vector<8x256xf32>
    %29 = arith.select %27, %25, %28 : vector<8x256xi1>, vector<8x256xf32>
    %c0_10 = arith.constant 0 : index
    %c0_11 = arith.constant 0 : index
    %30 = vector.load %arg5[%c0_10, %c0_11] : memref<128x256xf32, #tpu.memory_space<vmem>>, vector<8x256xf32>
    tpu.vector_store %arg5[%c0_10, %c0_11], %29 {strides = array<i32>} : memref<128x256xf32, #tpu.memory_space<vmem>>, vector<8x256xf32>,
    %c0_12 = arith.constant 0 : index
    %c112 = arith.constant 112 : index
    %31 = vector.load %arg4[%c0_12, %c112] : memref<8x512xf32, #tpu.memory_space<vmem>>, vector<8x256xf32>
    %c8 = arith.constant 8 : index
    %c0_13 = arith.constant 0 : index
    %32 = vector.load %arg5[%c8, %c0_13] : memref<128x256xf32, #tpu.memory_space<vmem>>, vector<8x256xf32>
    tpu.vector_store %arg5[%c8, %c0_13], %31 {strides = array<i32>} : memref<128x256xf32, #tpu.memory_space<vmem>>, vector<8x256xf32>,
    %c0_14 = arith.constant 0 : index
    %c113 = arith.constant 113 : index
    %33 = vector.load %arg4[%c0_14, %c113] : memref<8x512xf32, #tpu.memory_space<vmem>>, vector<8x256xf32>
    %cst_15 = arith.constant 0.000000e+00 : f32
    %34 = vector.shape_cast %24 : vector<1x256xi1> to vector<1x256xi1>
    %35 = vector.broadcast %34 : vector<1x256xi1> to vector<8x256xi1>
    %36 = vector.broadcast %cst_15 : f32 to vector<8x256xf32>
    %37 = arith.select %35, %33, %36 : vector<8x256xi1>, vector<8x256xf32>
    %c16 = arith.constant 16 : index
    %c0_16 = arith.constant 0 : index
    %38 = vector.load %arg5[%c16, %c0_16] : memref<128x256xf32, #tpu.memory_space<vmem>>, vector<8x256xf32>
    tpu.vector_store %arg5[%c16, %c0_16], %37 {strides = array<i32>} : memref<128x256xf32, #tpu.memory_space<vmem>>, vector<8x256xf32>,
    %c0_17 = arith.constant 0 : index
    %c127 = arith.constant 127 : index
    %39 = vector.load %arg4[%c0_17, %c127] : memref<8x512xf32, #tpu.memory_space<vmem>>, vector<8x256xf32>
    %cst_18 = arith.constant 0.000000e+00 : f32
    %40 = vector.shape_cast %22 : vector<1x256xi1> to vector<1x256xi1>
    %41 = vector.broadcast %40 : vector<1x256xi1> to vector<8x256xi1>
    %42 = vector.broadcast %cst_18 : f32 to vector<8x256xf32>
    %43 = arith.select %41, %39, %42 : vector<8x256xi1>, vector<8x256xf32>
    %c24 = arith.constant 24 : index
    %c0_19 = arith.constant 0 : index
    %44 = vector.load %arg5[%c24, %c0_19] : memref<128x256xf32, #tpu.memory_space<vmem>>, vector<8x256xf32>
    tpu.vector_store %arg5[%c24, %c0_19], %43 {strides = array<i32>} : memref<128x256xf32, #tpu.memory_space<vmem>>, vector<8x256xf32>,
    %c0_20 = arith.constant 0 : index
    %c128_21 = arith.constant 128 : index
    %45 = vector.load %arg4[%c0_20, %c128_21] : memref<8x512xf32, #tpu.memory_space<vmem>>, vector<8x256xf32>
    %c32 = arith.constant 32 : index
    %c0_22 = arith.constant 0 : index
    %46 = vector.load %arg5[%c32, %c0_22] : memref<128x256xf32, #tpu.memory_space<vmem>>, vector<8x256xf32>
    tpu.vector_store %arg5[%c32, %c0_22], %45 {strides = array<i32>} : memref<128x256xf32, #tpu.memory_space<vmem>>, vector<8x256xf32>,
    %c0_23 = arith.constant 0 : index
    %c129 = arith.constant 129 : index
    %47 = vector.load %arg4[%c0_23, %c129] : memref<8x512xf32, #tpu.memory_space<vmem>>, vector<8x256xf32>
    %cst_24 = arith.constant 0.000000e+00 : f32
    %48 = vector.shape_cast %24 : vector<1x256xi1> to vector<1x256xi1>
    %49 = vector.broadcast %48 : vector<1x256xi1> to vector<8x256xi1>
    %50 = vector.broadcast %cst_24 : f32 to vector<8x256xf32>
    %51 = arith.select %49, %47, %50 : vector<8x256xi1>, vector<8x256xf32>
    %c40 = arith.constant 40 : index
    %c0_25 = arith.constant 0 : index
    %52 = vector.load %arg5[%c40, %c0_25] : memref<128x256xf32, #tpu.memory_space<vmem>>, vector<8x256xf32>
    tpu.vector_store %arg5[%c40, %c0_25], %51 {strides = array<i32>} : memref<128x256xf32, #tpu.memory_space<vmem>>, vector<8x256xf32>,
    %c0_26 = arith.constant 0 : index
    %c143 = arith.constant 143 : index
    %53 = vector.load %arg4[%c0_26, %c143] : memref<8x512xf32, #tpu.memory_space<vmem>>, vector<8x256xf32>
    %cst_27 = arith.constant 0.000000e+00 : f32
    %54 = vector.shape_cast %22 : vector<1x256xi1> to vector<1x256xi1>
    %55 = vector.broadcast %54 : vector<1x256xi1> to vector<8x256xi1>
    %56 = vector.broadcast %cst_27 : f32 to vector<8x256xf32>
    %57 = arith.select %55, %53, %56 : vector<8x256xi1>, vector<8x256xf32>
    %c48 = arith.constant 48 : index
    %c0_28 = arith.constant 0 : index
    %58 = vector.load %arg5[%c48, %c0_28] : memref<128x256xf32, #tpu.memory_space<vmem>>, vector<8x256xf32>
    tpu.vector_store %arg5[%c48, %c0_28], %57 {strides = array<i32>} : memref<128x256xf32, #tpu.memory_space<vmem>>, vector<8x256xf32>,
    %c0_29 = arith.constant 0 : index
    %c144 = arith.constant 144 : index
    %59 = vector.load %arg4[%c0_29, %c144] : memref<8x512xf32, #tpu.memory_space<vmem>>, vector<8x256xf32>
    %c56 = arith.constant 56 : index
    %c0_30 = arith.constant 0 : index
    %60 = vector.load %arg5[%c56, %c0_30] : memref<128x256xf32, #tpu.memory_space<vmem>>, vector<8x256xf32>
    tpu.vector_store %arg5[%c56, %c0_30], %59 {strides = array<i32>} : memref<128x256xf32, #tpu.memory_space<vmem>>, vector<8x256xf32>,
    %c0_31 = arith.constant 0 : index
    %c145 = arith.constant 145 : index
    %61 = vector.load %arg4[%c0_31, %c145] : memref<8x512xf32, #tpu.memory_space<vmem>>, vector<8x256xf32>
    %cst_32 = arith.constant 0.000000e+00 : f32
    %62 = vector.shape_cast %24 : vector<1x256xi1> to vector<1x256xi1>
    %63 = vector.broadcast %62 : vector<1x256xi1> to vector<8x256xi1>
    %64 = vector.broadcast %cst_32 : f32 to vector<8x256xf32>
    %65 = arith.select %63, %61, %64 : vector<8x256xi1>, vector<8x256xf32>
    %c64 = arith.constant 64 : index
    %c0_33 = arith.constant 0 : index
    %66 = vector.load %arg5[%c64, %c0_33] : memref<128x256xf32, #tpu.memory_space<vmem>>, vector<8x256xf32>
    tpu.vector_store %arg5[%c64, %c0_33], %65 {strides = array<i32>} : memref<128x256xf32, #tpu.memory_space<vmem>>, vector<8x256xf32>,
    %cst_34 = arith.constant 1.000000e+00 : f32
    %67 = vector.broadcast %cst_34 : f32 to vector<8x256xf32>
    %c72 = arith.constant 72 : index
    %c0_35 = arith.constant 0 : index
    %68 = vector.load %arg5[%c72, %c0_35] : memref<128x256xf32, #tpu.memory_space<vmem>>, vector<8x256xf32>
    tpu.vector_store %arg5[%c72, %c0_35], %67 {strides = array<i32>} : memref<128x256xf32, #tpu.memory_space<vmem>>, vector<8x256xf32>,
    %cst_36 = arith.constant 0.000000e+00 : f32
    %69 = vector.broadcast %cst_36 : f32 to vector<48x256xf32>
    %c80 = arith.constant 80 : index
    %c0_37 = arith.constant 0 : index
    %70 = vector.load %arg5[%c80, %c0_37] : memref<128x256xf32, #tpu.memory_space<vmem>>, vector<48x256xf32>
    tpu.vector_store %arg5[%c80, %c0_37], %69 {strides = array<i32>} : memref<128x256xf32, #tpu.memory_space<vmem>>, vector<48x256xf32>,
    %c0_38 = arith.constant 0 : index
    %c0_39 = arith.constant 0 : index
    %71 = vector.load %arg1[%c0_38, %c0_39] : memref<40x128xf32, #tpu.memory_space<vmem>>, vector<16x128xf32>
    %c0_40 = arith.constant 0 : index
    %c0_41 = arith.constant 0 : index
    %72 = vector.load %arg5[%c0_40, %c0_41] : memref<128x256xf32, #tpu.memory_space<vmem>>, vector<128x256xf32>
    %cst_42 = arith.constant dense<0.000000e+00> : vector<16x256xf32>
    %73 = tpu.matmul %71, %72, %cst_42 {dimension_numbers = #tpu.dot_dimension_numbers<[1], [0], [0], [1], [0, 0, 1, 1], [], []>} : vector<16x128xf32>, vector<128x256xf32>, vector<16x256xf32> -> vector<16x256xf32>
    %cst_43 = arith.constant 0.000000e+00 : f32
    %74 = vector.broadcast %cst_43 : f32 to vector<16x256xf32>
    %75 = arith.maximumf %73, %74 : vector<16x256xf32>
    %cst_44 = arith.constant dense<0.000000e+00> : vector<16xf32>
    %76 = vector.multi_reduction <add>, %75, %cst_44 [1] : vector<16x256xf32> to vector<16xf32>
    %77 = vector.shape_cast %76 : vector<16xf32> to vector<16x1xf32>
    %cst_45 = arith.constant 3.906250e-03 : f32
    %78 = vector.broadcast %cst_45 : f32 to vector<16x1xf32>
    %79 = arith.mulf %77, %78 : vector<16x1xf32>
    %c16_46 = arith.constant 16 : index
    %c0_47 = arith.constant 0 : index
    %80 = vector.load %arg1[%c16_46, %c0_47] : memref<40x128xf32, #tpu.memory_space<vmem>>, vector<16x128xf32>
    %c32_48 = arith.constant 32 : index
    %c0_49 = arith.constant 0 : index
    %81 = vector.load %arg1[%c32_48, %c0_49] : memref<40x128xf32, #tpu.memory_space<vmem>>, vector<1x128xf32>
    %82 = vector.broadcast %79 : vector<16x1xf32> to vector<16x128xf32>
    %83 = arith.mulf %82, %80 : vector<16x128xf32>
    %84 = tpu.iota {dimensions = array<i32: 1>} : vector<1x128xi32>
    %c10_i32 = arith.constant 10 : i32
    %85 = vector.broadcast %c10_i32 : i32 to vector<1x128xi32>
    %86 = arith.cmpi slt, %84, %85 : vector<1x128xi32>
    %87 = vector.extract_strided_slice %83 {offsets = [0, 0], sizes = [8, 128], strides = [1, 1]} : vector<16x128xf32> to vector<8x128xf32>
    %cst_50 = arith.constant dense<0.000000e+00> : vector<128xf32>
    %88 = vector.multi_reduction <add>, %87, %cst_50 [0] : vector<8x128xf32> to vector<128xf32>
    %89 = vector.shape_cast %88 : vector<128xf32> to vector<1x128xf32>
    %90 = arith.addf %89, %81 : vector<1x128xf32>
    %cst_51 = arith.constant -1.000000e+30 : f32
    %91 = vector.broadcast %cst_51 : f32 to vector<1x128xf32>
    %92 = arith.select %86, %90, %91 : vector<1x128xi1>, vector<1x128xf32>
    %cst_52 = arith.constant dense<0xFF800000> : vector<1xf32>
    %93 = vector.multi_reduction <maximumf>, %92, %cst_52 [1] : vector<1x128xf32> to vector<1xf32>
    %94 = vector.shape_cast %93 : vector<1xf32> to vector<1x1xf32>
    %95 = vector.broadcast %94 : vector<1x1xf32> to vector<1x128xf32>
    %96 = arith.subf %92, %95 : vector<1x128xf32>
    %97 = math.exp %96 : vector<1x128xf32>
    %cst_53 = arith.constant 0.000000e+00 : f32
    %98 = vector.broadcast %cst_53 : f32 to vector<1x128xf32>
    %99 = arith.select %86, %97, %98 : vector<1x128xi1>, vector<1x128xf32>
    %cst_54 = arith.constant dense<0.000000e+00> : vector<1xf32>
    %100 = vector.multi_reduction <add>, %99, %cst_54 [1] : vector<1x128xf32> to vector<1xf32>
    %101 = vector.shape_cast %100 : vector<1xf32> to vector<1x1xf32>
    %102 = math.log %101 : vector<1x1xf32>
    %103 = arith.addf %102, %94 : vector<1x1xf32>
    %c0_55 = arith.constant 0 : index
    %104 = memref.load %arg2[%c0_55] : memref<2xi32, #tpu.memory_space<smem>>
    %105 = vector.broadcast %104 : i32 to vector<1x128xi32>
    %106 = arith.cmpi eq, %84, %105 : vector<1x128xi32>
    %cst_56 = arith.constant 0.000000e+00 : f32
    %107 = vector.broadcast %cst_56 : f32 to vector<1x128xf32>
    %108 = arith.select %106, %90, %107 : vector<1x128xi1>, vector<1x128xf32>
    %cst_57 = arith.constant dense<0.000000e+00> : vector<1xf32>
    %109 = vector.multi_reduction <add>, %108, %cst_57 [1] : vector<1x128xf32> to vector<1xf32>
    %110 = vector.shape_cast %109 : vector<1xf32> to vector<1x1xf32>
    %111 = arith.subf %103, %110 : vector<1x1xf32>
    %112 = vector.extract_strided_slice %83 {offsets = [8, 0], sizes = [8, 128], strides = [1, 1]} : vector<16x128xf32> to vector<8x128xf32>
    %cst_58 = arith.constant dense<0.000000e+00> : vector<128xf32>
    %113 = vector.multi_reduction <add>, %112, %cst_58 [0] : vector<8x128xf32> to vector<128xf32>
    %114 = vector.shape_cast %113 : vector<128xf32> to vector<1x128xf32>
    %115 = arith.addf %114, %81 : vector<1x128xf32>
    %cst_59 = arith.constant -1.000000e+30 : f32
    %116 = vector.broadcast %cst_59 : f32 to vector<1x128xf32>
    %117 = arith.select %86, %115, %116 : vector<1x128xi1>, vector<1x128xf32>
    %cst_60 = arith.constant dense<0xFF800000> : vector<1xf32>
    %118 = vector.multi_reduction <maximumf>, %117, %cst_60 [1] : vector<1x128xf32> to vector<1xf32>
    %119 = vector.shape_cast %118 : vector<1xf32> to vector<1x1xf32>
    %120 = vector.broadcast %119 : vector<1x1xf32> to vector<1x128xf32>
    %121 = arith.subf %117, %120 : vector<1x128xf32>
    %122 = math.exp %121 : vector<1x128xf32>
    %cst_61 = arith.constant 0.000000e+00 : f32
    %123 = vector.broadcast %cst_61 : f32 to vector<1x128xf32>
    %124 = arith.select %86, %122, %123 : vector<1x128xi1>, vector<1x128xf32>
    %cst_62 = arith.constant dense<0.000000e+00> : vector<1xf32>
    %125 = vector.multi_reduction <add>, %124, %cst_62 [1] : vector<1x128xf32> to vector<1xf32>
    %126 = vector.shape_cast %125 : vector<1xf32> to vector<1x1xf32>
    %127 = math.log %126 : vector<1x1xf32>
    %128 = arith.addf %127, %119 : vector<1x1xf32>
    %c1 = arith.constant 1 : index
    %129 = memref.load %arg2[%c1] : memref<2xi32, #tpu.memory_space<smem>>
    %130 = vector.broadcast %129 : i32 to vector<1x128xi32>
    %131 = arith.cmpi eq, %84, %130 : vector<1x128xi32>
    %cst_63 = arith.constant 0.000000e+00 : f32
    %132 = vector.broadcast %cst_63 : f32 to vector<1x128xf32>
    %133 = arith.select %131, %115, %132 : vector<1x128xi1>, vector<1x128xf32>
    %cst_64 = arith.constant dense<0.000000e+00> : vector<1xf32>
    %134 = vector.multi_reduction <add>, %133, %cst_64 [1] : vector<1x128xf32> to vector<1xf32>
    %135 = vector.shape_cast %134 : vector<1xf32> to vector<1x1xf32>
    %136 = arith.subf %128, %135 : vector<1x1xf32>
    %137 = arith.addf %111, %136 : vector<1x1xf32>
    %cst_65 = arith.constant 5.000000e-01 : f32
    %138 = vector.broadcast %cst_65 : f32 to vector<1x1xf32>
    %139 = arith.mulf %137, %138 : vector<1x1xf32>
    %140 = tpu.iota {dimensions = array<i32: 0>} : vector<8x128xi32>
    %c7_i32 = arith.constant 7 : i32
    %141 = vector.broadcast %c7_i32 : i32 to vector<8x128xi32>
    %142 = arith.cmpi eq, %140, %141 : vector<8x128xi32>
    %143 = vector.shape_cast %139 : vector<1x1xf32> to vector<1x1xf32>
    %144 = vector.broadcast %143 : vector<1x1xf32> to vector<8x128xf32>
    %cst_66 = arith.constant 0.000000e+00 : f32
    %145 = vector.broadcast %cst_66 : f32 to vector<8x128xf32>
    %146 = arith.select %142, %144, %145 : vector<8x128xi1>, vector<8x128xf32>
    %c0_i32_67 = arith.constant 0 : i32
    %147 = vector.broadcast %c0_i32_67 : i32 to vector<8x128xi32>
    %148 = arith.cmpi eq, %140, %147 : vector<8x128xi32>
    %149 = vector.shape_cast %90 : vector<1x128xf32> to vector<1x128xf32>
    %150 = vector.broadcast %149 : vector<1x128xf32> to vector<8x128xf32>
    %151 = arith.select %148, %150, %146 : vector<8x128xi1>, vector<8x128xf32>
    %c1_i32_68 = arith.constant 1 : i32
    %152 = vector.broadcast %c1_i32_68 : i32 to vector<8x128xi32>
    %153 = arith.cmpi eq, %140, %152 : vector<8x128xi32>
    %154 = vector.shape_cast %115 : vector<1x128xf32> to vector<1x128xf32>
    %155 = vector.broadcast %154 : vector<1x128xf32> to vector<8x128xf32>
    %156 = arith.select %153, %155, %151 : vector<8x128xi1>, vector<8x128xf32>
    %c0_69 = arith.constant 0 : index
    %c0_70 = arith.constant 0 : index
    %157 = vector.load %arg3[%c0_69, %c0_70] : memref<8x128xf32, #tpu.memory_space<vmem>>, vector<8x128xf32>
    tpu.vector_store %arg3[%c0_69, %c0_70], %156 {strides = array<i32>} : memref<8x128xf32, #tpu.memory_space<vmem>>, vector<8x128xf32>,
    return
  }
}

</mosaic_0001>

<llo_original>
// kernel: special_model_forward.1
$region0: #{special_model_forward.1}
  #allocation0 [shape = 'u32[]', space=smem, size = 0x4, offset = 0x4, fixed_abs, tag = 'smem constant byte address 0x4 - core index']
  #allocation1 [shape = 'u32[144,128]{1,0:T(1,128)}', space=vmem, size = 0x12000, scoped, tag = 'internal scratch']
  #allocation2 [shape = 'f32[8,512]{1,0:T(8,128)}', space=vmem, size = 0x4000, scoped, tag = 'scratch operand']
  #allocation3 [shape = 'f32[128,256]{1,0:T(8,128)}', space=vmem, size = 0x20000, scoped, tag = 'scratch operand']
  %s0 = inlined_call_operand.vmem [shape: f32[8,256], index: 0, kind: input, shape index: {}]
  %s1 = inlined_call_operand.vmem [shape: f32[40,128], index: 1, kind: input, shape index: {}]
  %s2 = inlined_call_operand.vmem [shape: s32[2], index: 2, kind: input, shape index: {}]
  %s3 = inlined_call_operand.vmem [shape: f32[8,128], index: 3, kind: output, shape index: {}]
  %s4 = sld [smem:[#allocation0]]
  $region26: #{special_model_forward.1} parent=0
    _
  %s6 = ssub.s32 1, %s4
  %s7 = scalar_select 0, %s6, %s4
  $region1: #{special_model_forward.1} parent=0
    #allocation4 [shape = 'u8[512]{0}', space=smem, size = 0x200, scoped, tag = 'input window, operand 2, single buffered']
    #allocation5 [shape = 's32[1]{0}', space=sflag, size = 0x4, scoped, tag = 'scoped memory for special_model_forward.1']
    %8 = vsyncpa [#allocation5], 0
    // Predicated region
    $region2: #{special_model_forward.1} parent=1 // pred_check
      _
    $region3: #{special_model_forward.1} parent=1 // pred_check_branch
      %10 = sbr.rel (0) target = $region5
    $region4: #{special_model_forward.1} parent=1 // pred_region
      _
    $region5: #{special_model_forward.1} parent=1 // pred_fallthru
      _
    // Predicated region
    $region6: #{special_model_forward.1} parent=1 // pred_check
      _
    $region7: #{special_model_forward.1} parent=1 // pred_check_branch
      %12 = sbr.rel (0) target = $region9
    $region8: #{special_model_forward.1} parent=1 // pred_region
      _
    $region9: #{special_model_forward.1} parent=1 // pred_fallthru
      _
    // Predicated region
    $region10: #{special_model_forward.1} parent=1 // pred_check
      _
    $region11: #{special_model_forward.1} parent=1 // pred_check_branch
      %14 = sbr.rel (0) target = $region13
    $region12: #{special_model_forward.1} parent=1 // pred_region
      %s16 = ssub.s32 16, 16
      %17 = vsyncadd [#allocation5], %s16
      %s19 = sshll.u32 %s2, 4
      %s20 = int_to_ptr.vmem [resolvable:$true] %s19
      %22 = dma.vmem_to_smem %s20, 16, [#allocation4], [#allocation5]
    $region13: #{special_model_forward.1} parent=1 // pred_fallthru
      _
    // Predicated region
    $region14: #{special_model_forward.1} parent=1 // pred_check
      _
    $region15: #{special_model_forward.1} parent=1 // pred_check_branch
      %24 = sbr.rel (0) target = $region17
    $region16: #{special_model_forward.1} parent=1 // pred_region
      %25 = dma.done [#allocation5], 16
    $region17: #{special_model_forward.1} parent=1 // pred_fallthru
      _
    %26 = sfence
    %27 = vst [vmem:[#allocation2] sm:$0xff] 0.0
    %28 = vst [vmem:[#allocation2 + $0x8] sm:$0xff] 0.0
    %29 = vst [vmem:[#allocation2 + $0x10] sm:$0xff] 0.0
    %30 = vst [vmem:[#allocation2 + $0x18] sm:$0xff] 0.0
    %v31 = vld [vmem:[%s0] sm:$0xff]
    %v32 = vld [vmem:[%s0 + $0x8] sm:$0xff]
    %33 = vst [vmem:[#allocation2 + $0x8] sm:$0xff] %v31
    %34 = vst [vmem:[#allocation2 + $0x10] sm:$0xff] %v32
    %v35 = vlaneseq
    %v36 = vand.u32 %v35, 127
    %v37 = vadd.s32 %v36, 128
    %vm38 = vcmp.lt.s32.totalorder %v36, 0
    %v39 = vsub.s32 0, %v36
    %v40 = vsel %vm38, %v39, %v36
    %v41 = vshrl.u32 %v40, 4
    %v42 = vand.u32 %v40, 15
    %v43 = vsub.s32 0, %v42
    %v44 = vsel %vm38, %v43, %v42
    %vm45 = vcmp.lt.s32.totalorder %v37, 0
    %v46 = vsub.s32 0, %v37
    %v47 = vsel %vm45, %v46, %v37
    %v48 = vshrl.u32 %v47, 4
    %v49 = vand.u32 %v47, 15
    %v50 = vsub.s32 0, %v49
    %v51 = vsel %vm45, %v50, %v49
    %vm52 = vcmp.ne.s32.totalorder %v44, 0
    %vm53 = vcmp.ne.s32.totalorder %v51, 0
    %vm54 = vcmp.lt.s32.totalorder %v44, 0
    %vm55 = vcmp.lt.s32.totalorder %v51, 0
    %vm56 = vmand %vm54, %vm52
    %vm57 = vmand %vm55, %vm53
    %v58 = vadd.s32 %v44, 16
    %v59 = vadd.s32 %v51, 16
    %v60 = vsel %vm56, %v58, %v44
    %v61 = vsel %vm57, %v59, %v51
    %vm62 = vcmp.ne.s32.totalorder %v60, 0
    %vm63 = vcmp.ne.s32.totalorder %v61, 0
    %vm64 = vcmp.ne.s32.totalorder %v60, 15
    %vm65 = vcmp.ne.s32.totalorder %v61, 15
    %v66 = vld [vmem:[#allocation2] sm:$0xff]
    %v67 = vld [vmem:[#allocation2 + $0x8] sm:$0xff]
    %v68 = vld [vmem:[#allocation2 + $0x10] sm:$0xff]
    %v69 = vsel %vm62, 1, 0
    %v70 = vsel %vm63, 1, 0
    %vm71 = vcmp.eq.s32.totalorder %v69, 1
    %vm72 = vcmp.eq.s32.totalorder %v70, 1
    %76 = vrot.lane.b32.xlu0 %v66, 17
    %v77 = vpop.permute.xlu0 %76
    %78 = vrot.lane.b32.xlu0 %v67, 17
    %v79 = vpop.permute.xlu0 %78
    %80 = vrot.lane.b32.xlu0 %v68, 17
    %v81 = vpop.permute.xlu0 %80
    %vm82 = vcmask 138240
    %v83 = vsel %vm82, %v77, %v79
    %v84 = vsel %vm82, %v79, %v81
    %v87 = vsel %vm71, %v83, 0.0
    %v88 = vsel %vm72, %v84, 0.0
    %89 = vst [vmem:[#allocation3] sm:$0xff] %v87
    %90 = vst [vmem:[#allocation3 + $0x8] sm:$0xff] %v88
    %v91 = vld [vmem:[#allocation2] sm:$0xff]
    %v92 = vld [vmem:[#allocation2 + $0x8] sm:$0xff]
    %v93 = vld [vmem:[#allocation2 + $0x10] sm:$0xff]
    %97 = vrot.lane.b32.xlu0 %v91, 16
    %v98 = vpop.permute.xlu0 %97
    %99 = vrot.lane.b32.xlu0 %v92, 16
    %v100 = vpop.permute.xlu0 %99
    %101 = vrot.lane.b32.xlu0 %v93, 16
    %v102 = vpop.permute.xlu0 %101
    %vm103 = vcmask 130048
    %v104 = vsel %vm103, %v98, %v100
    %v105 = vsel %vm103, %v100, %v102
    %108 = vst [vmem:[#allocation3 + $0x10] sm:$0xff] %v104
    %109 = vst [vmem:[#allocation3 + $0x18] sm:$0xff] %v105
    %v110 = vld [vmem:[#allocation2] sm:$0xff]
    %v111 = vld [vmem:[#allocation2 + $0x8] sm:$0xff]
    %v112 = vld [vmem:[#allocation2 + $0x10] sm:$0xff]
    %v113 = vsel %vm64, 1, 0
    %v114 = vsel %vm65, 1, 0
    %vm115 = vcmp.eq.s32.totalorder %v113, 1
    %vm116 = vcmp.eq.s32.totalorder %v114, 1
    %120 = vrot.lane.b32.xlu0 %v110, 15
    %v121 = vpop.permute.xlu0 %120
    %122 = vrot.lane.b32.xlu0 %v111, 15
    %v123 = vpop.permute.xlu0 %122
    %124 = vrot.lane.b32.xlu0 %v112, 15
    %v125 = vpop.permute.xlu0 %124
    %vm126 = vcmask 121856
    %v127 = vsel %vm126, %v121, %v123
    %v128 = vsel %vm126, %v123, %v125
    %v131 = vsel %vm115, %v127, 0.0
    %v132 = vsel %vm116, %v128, 0.0
    %133 = vst [vmem:[#allocation3 + $0x20] sm:$0xff] %v131
    %134 = vst [vmem:[#allocation3 + $0x28] sm:$0xff] %v132
    %v135 = vld [vmem:[#allocation2] sm:$0xff]
    %v136 = vld [vmem:[#allocation2 + $0x8] sm:$0xff]
    %v137 = vld [vmem:[#allocation2 + $0x10] sm:$0xff]
    %141 = vrot.lane.b32.xlu0 %v135, 1
    %v142 = vpop.permute.xlu0 %141
    %143 = vrot.lane.b32.xlu0 %v136, 1
    %v144 = vpop.permute.xlu0 %143
    %145 = vrot.lane.b32.xlu0 %v137, 1
    %v146 = vpop.permute.xlu0 %145
    %vm147 = vcmask 7168
    %v148 = vsel %vm147, %v142, %v144
    %v149 = vsel %vm147, %v144, %v146
    %v152 = vsel %vm71, %v148, 0.0
    %v153 = vsel %vm72, %v149, 0.0
    %154 = vst [vmem:[#allocation3 + $0x30] sm:$0xff] %v152
    %155 = vst [vmem:[#allocation3 + $0x38] sm:$0xff] %v153
    %v156 = vld [vmem:[#allocation2 + $0x8] sm:$0xff]
    %v157 = vld [vmem:[#allocation2 + $0x10] sm:$0xff]
    %158 = vst [vmem:[#allocation3 + $0x40] sm:$0xff] %v156
    %159 = vst [vmem:[#allocation3 + $0x48] sm:$0xff] %v157
    %v160 = vld [vmem:[#allocation2 + $0x8] sm:$0xff]
    %v161 = vld [vmem:[#allocation2 + $0x10] sm:$0xff]
    %v162 = vld [vmem:[#allocation2 + $0x18] sm:$0xff]
    %166 = vrot.lane.b32.xlu0 %v160, 127
    %v167 = vpop.permute.xlu0 %166
    %168 = vrot.lane.b32.xlu0 %v161, 127
    %v169 = vpop.permute.xlu0 %168
    %170 = vrot.lane.b32.xlu0 %v162, 127
    %v171 = vpop.permute.xlu0 %170
    %vm172 = vcmask 1039360
    %v173 = vsel %vm172, %v167, %v169
    %v174 = vsel %vm172, %v169, %v171
    %v177 = vsel %vm115, %v173, 0.0
    %v178 = vsel %vm116, %v174, 0.0
    %179 = vst [vmem:[#allocation3 + $0x50] sm:$0xff] %v177
    %180 = vst [vmem:[#allocation3 + $0x58] sm:$0xff] %v178
    %v181 = vld [vmem:[#allocation2 + $0x8] sm:$0xff]
    %v182 = vld [vmem:[#allocation2 + $0x10] sm:$0xff]
    %v183 = vld [vmem:[#allocation2 + $0x18] sm:$0xff]
    %187 = vrot.lane.b32.xlu0 %v181, 113
    %v188 = vpop.permute.xlu0 %187
    %189 = vrot.lane.b32.xlu0 %v182, 113
    %v190 = vpop.permute.xlu0 %189
    %191 = vrot.lane.b32.xlu0 %v183, 113
    %v192 = vpop.permute.xlu0 %191
    %vm193 = vcmask 924672
    %v194 = vsel %vm193, %v188, %v190
    %v195 = vsel %vm193, %v190, %v192
    %v198 = vsel %vm71, %v194, 0.0
    %v199 = vsel %vm72, %v195, 0.0
    %200 = vst [vmem:[#allocation3 + $0x60] sm:$0xff] %v198
    %201 = vst [vmem:[#allocation3 + $0x68] sm:$0xff] %v199
    %v202 = vld [vmem:[#allocation2 + $0x8] sm:$0xff]
    %v203 = vld [vmem:[#allocation2 + $0x10] sm:$0xff]
    %v204 = vld [vmem:[#allocation2 + $0x18] sm:$0xff]
    %208 = vrot.lane.b32.xlu0 %v202, 112
    %v209 = vpop.permute.xlu0 %208
    %210 = vrot.lane.b32.xlu0 %v203, 112
    %v211 = vpop.permute.xlu0 %210
    %212 = vrot.lane.b32.xlu0 %v204, 112
    %v213 = vpop.permute.xlu0 %212
    %vm214 = vcmask 916480
    %v215 = vsel %vm214, %v209, %v211
    %v216 = vsel %vm214, %v211, %v213
    %219 = vst [vmem:[#allocation3 + $0x70] sm:$0xff] %v215
    %220 = vst [vmem:[#allocation3 + $0x78] sm:$0xff] %v216
    %v221 = vld [vmem:[#allocation2 + $0x8] sm:$0xff]
    %v222 = vld [vmem:[#allocation2 + $0x10] sm:$0xff]
    %v223 = vld [vmem:[#allocation2 + $0x18] sm:$0xff]
    %227 = vrot.lane.b32.xlu0 %v221, 111
    %v228 = vpop.permute.xlu0 %227
    %229 = vrot.lane.b32.xlu0 %v222, 111
    %v230 = vpop.permute.xlu0 %229
    %231 = vrot.lane.b32.xlu0 %v223, 111
    %v232 = vpop.permute.xlu0 %231
    %vm233 = vcmask 908288
    %v234 = vsel %vm233, %v228, %v230
    %v235 = vsel %vm233, %v230, %v232
    %v238 = vsel %vm115, %v234, 0.0
    %v239 = vsel %vm116, %v235, 0.0
    %240 = vst [vmem:[#allocation3 + $0x80] sm:$0xff] %v238
    %241 = vst [vmem:[#allocation3 + $0x88] sm:$0xff] %v239
    %242 = vst [vmem:[#allocation3 + $0x90] sm:$0xff] 1.0
    %243 = vst [vmem:[#allocation3 + $0x98] sm:$0xff] 1.0
    %244 = vst [vmem:[#allocation3 + $0xa0] sm:$0xff] 0.0
    %245 = vst [vmem:[#allocation3 + $0xa8] sm:$0xff] 0.0
    %246 = vst [vmem:[#allocation3 + $0xb0] sm:$0xff] 0.0
    %247 = vst [vmem:[#allocation3 + $0xb8] sm:$0xff] 0.0
    %248 = vst [vmem:[#allocation3 + $0xc0] sm:$0xff] 0.0
    %249 = vst [vmem:[#allocation3 + $0xc8] sm:$0xff] 0.0
    %250 = vst [vmem:[#allocation3 + $0xd0] sm:$0xff] 0.0
    %251 = vst [vmem:[#allocation3 + $0xd8] sm:$0xff] 0.0
    %252 = vst [vmem:[#allocation3 + $0xe0] sm:$0xff] 0.0
    %253 = vst [vmem:[#allocation3 + $0xe8] sm:$0xff] 0.0
    %254 = vst [vmem:[#allocation3 + $0xf0] sm:$0xff] 0.0
    %255 = vst [vmem:[#allocation3 + $0xf8] sm:$0xff] 0.0
    %v256 = vld [vmem:[%s1] sm:$0xff]
    %v257 = vld [vmem:[%s1 + $0x8] sm:$0xff]
    %v258 = vld [vmem:[#allocation3] sm:$0xff]
    %v259 = vld [vmem:[#allocation3 + $0x8] sm:$0xff]
    %v260 = vld [vmem:[#allocation3 + $0x10] sm:$0xff]
    %v261 = vld [vmem:[#allocation3 + $0x18] sm:$0xff]
    %v262 = vld [vmem:[#allocation3 + $0x20] sm:$0xff]
    %v263 = vld [vmem:[#allocation3 + $0x28] sm:$0xff]
    %v264 = vld [vmem:[#allocation3 + $0x30] sm:$0xff]
    %v265 = vld [vmem:[#allocation3 + $0x38] sm:$0xff]
    %v266 = vld [vmem:[#allocation3 + $0x40] sm:$0xff]
    %v267 = vld [vmem:[#allocation3 + $0x48] sm:$0xff]
    %v268 = vld [vmem:[#allocation3 + $0x50] sm:$0xff]
    %v269 = vld [vmem:[#allocation3 + $0x58] sm:$0xff]
    %v270 = vld [vmem:[#allocation3 + $0x60] sm:$0xff]
    %v271 = vld [vmem:[#allocation3 + $0x68] sm:$0xff]
    %v272 = vld [vmem:[#allocation3 + $0x70] sm:$0xff]
    %v273 = vld [vmem:[#allocation3 + $0x78] sm:$0xff]
    %v274 = vld [vmem:[#allocation3 + $0x80] sm:$0xff]
    %v275 = vld [vmem:[#allocation3 + $0x88] sm:$0xff]
    %v276 = vld [vmem:[#allocation3 + $0x90] sm:$0xff]
    %v277 = vld [vmem:[#allocation3 + $0x98] sm:$0xff]
    %v278 = vld [vmem:[#allocation3 + $0xa0] sm:$0xff]
    %v279 = vld [vmem:[#allocation3 + $0xa8] sm:$0xff]
    %v280 = vld [vmem:[#allocation3 + $0xb0] sm:$0xff]
    %v281 = vld [vmem:[#allocation3 + $0xb8] sm:$0xff]
    %v282 = vld [vmem:[#allocation3 + $0xc0] sm:$0xff]
    %v283 = vld [vmem:[#allocation3 + $0xc8] sm:$0xff]
    %v284 = vld [vmem:[#allocation3 + $0xd0] sm:$0xff]
    %v285 = vld [vmem:[#allocation3 + $0xd8] sm:$0xff]
    %v286 = vld [vmem:[#allocation3 + $0xe0] sm:$0xff]
    %v287 = vld [vmem:[#allocation3 + $0xe8] sm:$0xff]
    %v288 = vld [vmem:[#allocation3 + $0xf0] sm:$0xff]
    %v289 = vld [vmem:[#allocation3 + $0xf8] sm:$0xff]
    %290 = vmatprep.subr.mxu0 %v259
    %291 = vmatpush1.msra.mxu0 %v258
    %292 = vmatprep.subr.mxu0 %v261
    %293 = vmatpush1.msra.mxu0 %v260
    %294 = vmatprep.subr.mxu0 %v263
    %295 = vmatpush1.msra.mxu0 %v262
    %296 = vmatprep.subr.mxu0 %v265
    %297 = vmatpush1.msra.mxu0 %v264
    %298 = vmatprep.subr.mxu0 %v267
    %299 = vmatpush1.msra.mxu0 %v266
    %300 = vmatprep.subr.mxu0 %v269
    %301 = vmatpush1.msra.mxu0 %v268
    %302 = vmatprep.subr.mxu0 %v271
    %303 = vmatpush1.msra.mxu0 %v270
    %304 = vmatprep.subr.mxu0 %v273
    %305 = vmatpush1.msra.mxu0 %v272
    %306 = vmatprep.subr.mxu0 %v275
    %307 = vmatpush1.msra.mxu0 %v274
    %308 = vmatprep.subr.mxu0 %v277
    %309 = vmatpush1.msra.mxu0 %v276
    %310 = vmatprep.subr.mxu0 %v279
    %311 = vmatpush1.msra.mxu0 %v278
    %312 = vmatprep.subr.mxu0 %v281
    %313 = vmatpush1.msra.mxu0 %v280
    %314 = vmatprep.subr.mxu0 %v283
    %315 = vmatpush1.msra.mxu0 %v282
    %316 = vmatprep.subr.mxu0 %v285
    %317 = vmatpush1.msra.mxu0 %v284
    %318 = vmatprep.subr.mxu0 %v287
    %319 = vmatpush1.msra.mxu0 %v286
    %320 = vmatprep.subr.mxu0 %v289
    %321 = vmatpush1.msra.mxu0 %v288
    %322 = vmatprep.subr.mxu0 0.0
    %323 = vmatpush1.msra.mxu0 0.0
    %324 = vmatprep.subr.mxu0 0.0
    %325 = vmatpush1.msra.mxu0 0.0
    %326 = vmatprep.subr.mxu0 0.0
    %327 = vmatpush1.msra.mxu0 0.0
    %328 = vmatprep.subr.mxu0 0.0
    %329 = vmatpush1.msra.mxu0 0.0
    %330 = vmatprep.subr.mxu0 0.0
    %331 = vmatpush1.msra.mxu0 0.0
    %332 = vmatprep.subr.mxu0 0.0
    %333 = vmatpush1.msra.mxu0 0.0
    %334 = vmatprep.subr.mxu0 0.0
    %335 = vmatpush1.msra.mxu0 0.0
    %336 = vmatprep.subr.mxu0 0.0
    %337 = vmatpush1.msra.mxu0 0.0
    %338 = vmatprep.subr.mxu0 0.0
    %339 = vmatpush1.msra.mxu0 0.0
    %340 = vmatprep.subr.mxu0 0.0
    %341 = vmatpush1.msra.mxu0 0.0
    %342 = vmatprep.subr.mxu0 0.0
    %343 = vmatpush1.msra.mxu0 0.0
    %344 = vmatprep.subr.mxu0 0.0
    %345 = vmatpush1.msra.mxu0 0.0
    %346 = vmatprep.subr.mxu0 0.0
    %347 = vmatpush1.msra.mxu0 0.0
    %348 = vmatprep.subr.mxu0 0.0
    %349 = vmatpush1.msra.mxu0 0.0
    %350 = vmatprep.subr.mxu0 0.0
    %351 = vmatpush1.msra.mxu0 0.0
    %352 = vmatprep.subr.mxu0 0.0
    %353 = vmatpush1.msra.mxu0 0.0
    %354 = vmatprep.mubr.f32.mxu0 0.0
    %355 = vmatmul.mubr.f32.gmra.mrb[0].mxu0 %v256
    %v356 = vpop.f32.mrb[0].mxu0
    %v357 = vadd.f32 0.0, %v356
    %v358 = vpop.f32.mrb[0].mxu0
    %v359 = vadd.f32 0.0, %v358
    %360 = vmatprep.mubr.f32.mxu0 0.0
    %361 = vmatmul.mubr.f32.gmra.mrb[0].mxu0 %v257
    %v362 = vpop.f32.mrb[0].mxu0
    %v363 = vadd.f32 0.0, %v362
    %v364 = vpop.f32.mrb[0].mxu0
    %v365 = vadd.f32 0.0, %v364
    %366 = vdwg.mxu0
    %v367 = vmax.f32 %v357, 0.0
    %v368 = vmax.f32 %v359, 0.0
    %v369 = vmax.f32 %v363, 0.0
    %v370 = vmax.f32 %v365, 0.0
    %v371 = vadd.f32 %v367, %v368
    %372 = vadd.xlane.f32.xlu0 %v371
    %v373 = vpop.xlane.xlu0 %372
    %v374 = vadd.f32 %v369, %v370
    %375 = vadd.xlane.f32.xlu0 %v374
    %v376 = vpop.xlane.xlu0 %375
    %v377 = vmul.f32 %v373, 0.00390625
    %v378 = vmul.f32 %v376, 0.00390625
    %v379 = vld [vmem:[%s1 + $0x10] sm:$0xff]
    %v380 = vld [vmem:[%s1 + $0x18] sm:$0xff]
    %v381 = vld [vmem:[%s1 + $0x20] sm:$0x1]
    %v382 = vmul.f32 %v377, %v379
    %v383 = vmul.f32 %v378, %v380
    %vm384 = vcmp.lt.s32.totalorder %v36, 10
    %v385 = vrot.slane %v382, 4
    %v386 = vadd.f32 %v382, %v385
    %v387 = vrot.slane %v386, 2
    %v388 = vadd.f32 %v386, %v387
    %v389 = vrot.slane %v388, 1
    %v390 = vadd.f32 %v388, %v389
    %v391 = vadd.f32 %v390, %v381
    %v392 = vsel %vm384, %v391, -1e+30
    %vm393 = vcmask 1040384
    %v394 = vsel %vm393, %v392, -inf
    %395 = vmax.xlane.f32.xlu0 %v394
    %v396 = vpop.xlane.xlu0 %395
    %v397 = vsub.f32 %v392, %v396
    %v398 = vmul.f32 %v397, 1.442695
    %v399 = vpow.pop %v398
    %v400 = vsel %vm384, %v399, 0.0
    %v401 = vsel %vm393, %v400, 0.0
    %402 = vadd.xlane.f32.xlu0 %v401
    %v403 = vpop.xlane.xlu0 %402
    %v404 = vlog2.pop %v403
    %v405 = vmul.f32 %v404, 0.6931472
    %v406 = vadd.f32 %v405, %v396
    %s407 = sld [smem:[#allocation4]]
    %v408 = vstv %s407
    %vm409 = vcmp.eq.s32.totalorder %v36, %v408
    %v410 = vsel %vm409, %v391, 0.0
    %v411 = vsel %vm393, %v410, 0.0
    %412 = vadd.xlane.f32.xlu0 %v411
    %v413 = vpop.xlane.xlu0 %412
    %v414 = vsub.f32 %v406, %v413
    %v415 = vrot.slane %v383, 4
    %v416 = vadd.f32 %v383, %v415
    %v417 = vrot.slane %v416, 2
    %v418 = vadd.f32 %v416, %v417
    %v419 = vrot.slane %v418, 1
    %v420 = vadd.f32 %v418, %v419
    %v421 = vadd.f32 %v420, %v381
    %v422 = vsel %vm384, %v421, -1e+30
    %v423 = vsel %vm393, %v422, -inf
    %424 = vmax.xlane.f32.xlu0 %v423
    %v425 = vpop.xlane.xlu0 %424
    %v426 = vsub.f32 %v422, %v425
    %v427 = vmul.f32 %v426, 1.442695
    %v428 = vpow.pop %v427
    %v429 = vsel %vm384, %v428, 0.0
    %v430 = vsel %vm393, %v429, 0.0
    %431 = vadd.xlane.f32.xlu0 %v430
    %v432 = vpop.xlane.xlu0 %431
    %v433 = vlog2.pop %v432
    %v434 = vmul.f32 %v433, 0.6931472
    %v435 = vadd.f32 %v434, %v425
    %s436 = sld [smem:[#allocation4 + $0x1]]
    %v437 = vstv %s436
    %vm438 = vcmp.eq.s32.totalorder %v36, %v437
    %v439 = vsel %vm438, %v421, 0.0
    %v440 = vsel %vm393, %v439, 0.0
    %441 = vadd.xlane.f32.xlu0 %v440
    %v442 = vpop.xlane.xlu0 %441
    %v443 = vsub.f32 %v435, %v442
    %v444 = vadd.f32 %v414, %v443
    %v445 = vmul.f32 %v444, 0.5
    %v446 = vlaneseq
    %v447 = vshrl.u32 %v446, 7
    %vm448 = vcmp.eq.s32.totalorder %v447, 7
    %v449 = vlaneseq
    %v450 = vshrl.u32 %v449, 7
    %v451 = vsub.s32 0, %v450
    %v452 = vrot.slane %v445, %v451
    %v453 = vsel %vm448, %v452, 0.0
    %vm454 = vcmp.eq.s32.totalorder %v447, 0
    %v455 = vlaneseq
    %v456 = vshrl.u32 %v455, 7
    %v457 = vsub.s32 0, %v456
    %v458 = vrot.slane %v391, %v457
    %v459 = vsel %vm454, %v458, %v453
    %vm460 = vcmp.eq.s32.totalorder %v447, 1
    %v461 = vlaneseq
    %v462 = vshrl.u32 %v461, 7
    %v463 = vsub.s32 0, %v462
    %v464 = vrot.slane %v421, %v463
    %v465 = vsel %vm460, %v464, %v459
    %466 = vst [vmem:[%s3] sm:$0xff] %v465
    // Predicated region
    $region18: #{special_model_forward.1} parent=1 // pred_check
      _
    $region19: #{special_model_forward.1} parent=1 // pred_check_branch
      %468 = sbr.rel (0) target = $region21
    $region20: #{special_model_forward.1} parent=1 // pred_region
      _
    $region21: #{special_model_forward.1} parent=1 // pred_fallthru
      _
    // Predicated region
    $region22: #{special_model_forward.1} parent=1 // pred_check
      _
    $region23: #{special_model_forward.1} parent=1 // pred_check_branch
      %470 = sbr.rel (0) target = $region25
    $region24: #{special_model_forward.1} parent=1 // pred_region
      _
    $region25: #{special_model_forward.1} parent=1 // pred_fallthru
      _
    %471 = vsyncpa [#allocation5], 1

</llo_original>
